<compile_context>
chip_gen: v6e
topology: v6e:2x2x1
jax: 0.10.0
libtpu: 0.0.40
codegen_flags: <defaults>
</compile_context>

<pallas_src>
import functools
import math

import jax
import jax.numpy as jnp
from jax.experimental import pallas as pl
from jax.experimental.pallas import tpu as pltpu


def _focal_kernel(pred_ref, label_ref, out_ref, *, alpha, gamma, eps,
                  log_eps_lo, log_eps_hi, inner_tiles, s_total,
                  needs_valid_mask, ignore_index):
    # pred_ref : [1, C, tile_ks, 128] logits, native dtype
    # label_ref: [1, 1, tile_ks, 128] int32 class ids in [0, C)
    # out_ref  : [1, 1, tile_ks, 128] f32 running per-position loss sums
    si = pl.program_id(2)

    @pl.when(si == 0)
    def _init():
        out_ref[...] = jnp.zeros_like(out_ref)

    x = pred_ref[0].astype(jnp.float32)           # [C, tks, 128]
    lbl = label_ref[0]                            # [1, tks, 128] int32
    c, tks, _ = x.shape

    # Class axis is the leading (vreg-batch) axis -> pure VPU elementwise
    # trees for the softmax reductions, full sublane/lane occupancy.
    m = jnp.max(x, axis=0, keepdims=True)         # [1, tks, 128]
    e = jnp.exp(x - m)                            # [C, tks, 128]   (EUP)
    denom = jnp.sum(e, axis=0, keepdims=True)     # [1, tks, 128]

    # Gather logit / exp at the label class with an unrolled select tree (VPU).
    x_true = jnp.zeros_like(m)
    e_true = jnp.zeros_like(m)
    for ci in range(c):
        hit = lbl == ci
        x_true = jnp.where(hit, x[ci:ci + 1], x_true)
        e_true = jnp.where(hit, e[ci:ci + 1], e_true)

    # log p in the log domain; clipping log_p == log of clip(p, eps, 1-eps).
    log_p = jnp.clip((x_true - m) - jnp.log(denom), log_eps_lo, log_eps_hi)
    # 1 - p (clamped); the approx reciprocal only feeds the focal weight.
    inv_denom = pl.reciprocal(denom, approx=True)
    one_minus_p = jnp.clip((denom - e_true) * inv_denom, eps, 1.0 - eps)

    if float(gamma) == float(int(gamma)) and int(gamma) >= 0:
        focal_w = jnp.ones_like(one_minus_p)      # exact integer power
        for _ in range(int(gamma)):
            focal_w = focal_w * one_minus_p
    else:
        focal_w = jnp.power(one_minus_p, jnp.float32(gamma))

    loss_pix = (-alpha) * focal_w * log_p         # [1, tks, 128]

    # Mask only the loss row: spatial padding / partial last tile / ignored
    # labels contribute exactly zero; the [C, ...] block is never masked.
    mask = None
    if needs_valid_mask:
        tile_idx = pl.program_id(1) * inner_tiles + si
        row = jax.lax.broadcasted_iota(jnp.int32, (1, tks, 128), 1)
        lane = jax.lax.broadcasted_iota(jnp.int32, (1, tks, 128), 2)
        mask = (tile_idx * (tks * 128) + row * 128 + lane) < s_total
    for ig in ignore_index:
        keep = lbl != ig
        mask = keep if mask is None else jnp.logical_and(mask, keep)
    if mask is not None:
        loss_pix = jnp.where(mask, loss_pix, 0.0)

    # Lane-dense accumulation on the resident output block: pure VPU adds,
    # no XLU and no narrow stores in the hot loop.
    out_ref[...] += loss_pix[None]                # [1, 1, tks, 128]


def focal_loss(pred_nchw, label_bhw, *, alpha=0.25, gamma=2, ignore_index=(),
               epsilon=1e-6):
    """pred_nchw: [B, C, H, W] float logits; label_bhw: [B, H, W] int labels."""
    b, c, h, w = pred_nchw.shape
    s = h * w
    n_elems = b * s

    ignore = tuple(int(i) for i in ignore_index)
    num_valid = sum(1 for ci in range(c) if ci not in set(ignore))
    assert num_valid > 0, "all classes are ignored"

    # Free views of contiguous NCHW: no transpose, no dtype upcast.
    pred3d = pred_nchw.reshape(b, c, s)
    label3d = label_bhw.reshape(b, 1, s).astype(jnp.int32)

    # Pad S to a multiple of 128 lanes so [B, C, S/128, 128] is a pure view.
    # (Only copies when H*W is not already a multiple of 128.)
    s_pad = ((s + 127) // 128) * 128
    if s_pad != s:
        pred3d = jnp.pad(pred3d, ((0, 0), (0, 0), (0, s_pad - s)))
        label3d = jnp.pad(label3d, ((0, 0), (0, 0), (0, s_pad - s)))
    ks = s_pad // 128
    pred4d = pred3d.reshape(b, c, ks, 128)
    label4d = label3d.reshape(b, 1, ks, 128)

    # ---- spatial tile sizing -------------------------------------------
    # Big enough that each grid step moves ~2 MiB from HBM (amortizes the
    # ~0.35us per-step overhead), small enough that double-buffered inputs +
    # in-kernel f32 temporaries stay inside a conservative VMEM budget that
    # is safe on v7x (64 MiB physical) and under v5e's smaller scoped default
    # once we set the limit explicitly below.
    pred_bytes = pred_nchw.dtype.itemsize
    in_bytes_per_pos = c * pred_bytes + 4             # pred + int32 label
    tmp_bytes_per_pos = 8 * c * 4 + 16                # conservative live f32 temps
    target_step_bytes = 2 * 1024 * 1024
    vmem_budget = 28 * 1024 * 1024
    tile_s = min(target_step_bytes // in_bytes_per_pos,
                 vmem_budget // (2 * in_bytes_per_pos + tmp_bytes_per_pos),
                 64 * 1024)
    if tile_s >= s_pad:
        tile_s = s_pad                                # one tile covers all of S
    else:
        tile_s = max(8 * 128, (tile_s // (8 * 128)) * (8 * 128))
    tile_ks = tile_s // 128
    num_tiles = -(-ks // tile_ks)

    # Second "parallel" axis so both v7x TensorCores get work when the batch
    # alone cannot be split evenly (B odd / B == 1); harmless on v5e/v6e.
    n_outer = 2 if (b % 2 == 1 and num_tiles >= 2) else 1
    inner_tiles = -(-num_tiles // n_outer)

    covered = n_outer * inner_tiles * tile_s
    needs_valid_mask = covered != s

    # Scoped-VMEM limit: computed from actual block sizes + temporaries with
    # headroom, capped well below v7x's 64 MiB; only passed when the default
    # scoped limit would not be enough.
    est_vmem = (2 * in_bytes_per_pos * tile_s         # double-buffered inputs
                + 2 * 4 * tile_s                      # double-buffered out block
                + tmp_bytes_per_pos * tile_s)         # in-kernel temporaries
    compiler_kwargs = dict(
        dimension_semantics=("parallel", "parallel", "arbitrary"))
    if est_vmem > (12 << 20):
        compiler_kwargs["vmem_limit_bytes"] = min(est_vmem + (8 << 20), 40 << 20)

    kernel = functools.partial(
        _focal_kernel, alpha=float(alpha), gamma=gamma, eps=float(epsilon),
        log_eps_lo=math.log(epsilon), log_eps_hi=math.log(1.0 - epsilon),
        inner_tiles=inner_tiles, s_total=s,
        needs_valid_mask=needs_valid_mask, ignore_index=ignore)

    partials = pl.pallas_call(
        kernel,
        out_shape=jax.ShapeDtypeStruct((b, n_outer, tile_ks, 128), jnp.float32),
        grid=(b, n_outer, inner_tiles),
        in_specs=[
            pl.BlockSpec((1, c, tile_ks, 128),
                         lambda bi, oi, si: (bi, 0, oi * inner_tiles + si, 0)),
            pl.BlockSpec((1, 1, tile_ks, 128),
                         lambda bi, oi, si: (bi, 0, oi * inner_tiles + si, 0)),
        ],
        out_specs=pl.BlockSpec((1, 1, tile_ks, 128),
                               lambda bi, oi, si: (bi, oi, 0, 0)),
        compiler_params=pltpu.CompilerParams(**compiler_kwargs),
    )(pred4d, label4d)                                # [B, n_outer, tile_ks, 128]

    # mean_over_valid_classes( per-class sum / (B*H*W) )
    #   == sum of kept per-pixel losses / (num_valid_classes * B*H*W)
    return jnp.sum(partials) / jnp.float32(num_valid * n_elems)


def _reference_focal_loss(pred_nchw, label_bhw, alpha=0.25, gamma=2,
                          ignore_index=(), epsilon=1e-6):
    """Pure-JAX reference mirroring the PyTorch module, for a sanity check."""
    b, c, h, w = pred_nchw.shape
    p = jax.nn.softmax(pred_nchw.astype(jnp.float32), axis=1)
    one_hot = jax.nn.one_hot(label_bhw, c, dtype=jnp.float32)   # [B,H,W,C]
    one_hot = jnp.transpose(one_hot, (0, 3, 1, 2))              # [B,C,H,W]
    losses = []
    for ci in range(c):
        if ci in set(ignore_index):
            continue
        pc = jnp.clip(p[:, ci], epsilon, 1.0 - epsilon)
        lc = one_hot[:, ci]
        loss = alpha * (1.0 - pc) ** gamma * (-(lc * jnp.log(pc)))
        losses.append(jnp.mean(loss))
    return jnp.mean(jnp.stack(losses))


if __name__ == "__main__":
    key = jax.random.PRNGKey(0)
    k1, k2, k3, k4 = jax.random.split(key, 4)

    # Case 1: S multiple of 128, f32 logits, no ignore_index.
    B, C, H, W = 2, 4, 16, 16
    pred = jax.random.normal(k1, (B, C, H, W), dtype=jnp.float32)
    label = jax.random.randint(k2, (B, H, W), 0, C, dtype=jnp.int32)
    out = jax.block_until_ready(focal_loss(pred, label, alpha=0.25, gamma=2))
    ref = _reference_focal_loss(pred, label, alpha=0.25, gamma=2)
    assert jnp.allclose(out, ref, rtol=2e-3, atol=1e-6), (out, ref)

    # Case 2: ragged spatial (pad + tail mask), bf16 logits, ignore_index.
    B, C, H, W = 1, 3, 10, 13
    pred = jax.random.normal(k3, (B, C, H, W), dtype=jnp.bfloat16)
    label = jax.random.randint(k4, (B, H, W), 0, C, dtype=jnp.int32)
    out = jax.block_until_ready(
        focal_loss(pred, label, alpha=0.25, gamma=2, ignore_index=(1,)))
    ref = _reference_focal_loss(pred, label, alpha=0.25, gamma=2,
                                ignore_index=(1,))
    assert jnp.allclose(out, ref, rtol=2e-3, atol=1e-6), (out, ref)

    print("KERNEL_OK")
</pallas_src>

<mosaic_0001>
module attributes {stable_mosaic.version = 11 : i64} {
  func.func @_focal_kernel(%arg0: i32, %arg1: i32, %arg2: i32, %arg3: memref<1x4x2x128xf32, #tpu.memory_space<vmem>>, %arg4: memref<1x1x2x128xi32, #tpu.memory_space<vmem>>, %arg5: memref<1x1x2x128xf32, #tpu.memory_space<vmem>>) attributes {dimension_semantics = [#tpu.dimension_semantics<parallel>, #tpu.dimension_semantics<parallel>, #tpu.dimension_semantics<arbitrary>], iteration_bounds = array<i64: 2, 1, 1>, scalar_prefetch = 0 : i64, scratch_operands = 0 : i64, tpu.core_type = #tpu.core_type<tc>, window_params = [{transform_indices = @transform_0, window_bounds = array<i64: 1, 4, 2, 128>}, {transform_indices = @transform_1, window_bounds = array<i64: 1, 1, 2, 128>}, {transform_indices = @transform_2, window_bounds = array<i64: 1, 1, 2, 128>}]} {
    %c0_i32 = arith.constant 0 : i32
    %0 = arith.cmpi eq, %arg2, %c0_i32 : i32
    %1 = arith.extui %0 : i1 to i32
    %c0_i32_0 = arith.constant 0 : i32
    %2 = arith.cmpi ne, %1, %c0_i32_0 : i32
    scf.if %2 {
      %cst_26 = arith.constant 0.000000e+00 : f32
      %64 = vector.broadcast %cst_26 : f32 to vector<1x1x2x128xf32>
      %c0_27 = arith.constant 0 : index
      %c0_28 = arith.constant 0 : index
      %c0_29 = arith.constant 0 : index
      %c0_30 = arith.constant 0 : index
      %65 = vector.load %arg5[%c0_27, %c0_28, %c0_29, %c0_30] : memref<1x1x2x128xf32, #tpu.memory_space<vmem>>, vector<1x1x2x128xf32>
      tpu.vector_store %arg5[%c0_27, %c0_28, %c0_29, %c0_30], %64 {strides = array<i32>} : memref<1x1x2x128xf32, #tpu.memory_space<vmem>>, vector<1x1x2x128xf32>,
    } else {
    }
    %c0 = arith.constant 0 : index
    %c0_1 = arith.constant 0 : index
    %c0_2 = arith.constant 0 : index
    %c0_3 = arith.constant 0 : index
    %3 = vector.load %arg3[%c0, %c0_1, %c0_2, %c0_3] : memref<1x4x2x128xf32, #tpu.memory_space<vmem>>, vector<1x4x2x128xf32>
    %4 = vector.shape_cast %3 : vector<1x4x2x128xf32> to vector<4x2x128xf32>
    %c0_4 = arith.constant 0 : index
    %c0_5 = arith.constant 0 : index
    %c0_6 = arith.constant 0 : index
    %c0_7 = arith.constant 0 : index
    %5 = vector.load %arg4[%c0_4, %c0_5, %c0_6, %c0_7] : memref<1x1x2x128xi32, #tpu.memory_space<vmem>>, vector<1x1x2x128xi32>
    %6 = vector.shape_cast %5 : vector<1x1x2x128xi32> to vector<1x2x128xi32>
    %cst = arith.constant dense<0xFF800000> : vector<2x128xf32>
    %7 = vector.multi_reduction <maximumf>, %4, %cst [0] : vector<4x2x128xf32> to vector<2x128xf32>
    %8 = vector.shape_cast %7 : vector<2x128xf32> to vector<1x2x128xf32>
    %9 = vector.broadcast %8 : vector<1x2x128xf32> to vector<4x2x128xf32>
    %10 = arith.subf %4, %9 : vector<4x2x128xf32>
    %11 = math.exp %10 : vector<4x2x128xf32>
    %cst_8 = arith.constant dense<0.000000e+00> : vector<2x128xf32>
    %12 = vector.multi_reduction <add>, %11, %cst_8 [0] : vector<4x2x128xf32> to vector<2x128xf32>
    %13 = vector.shape_cast %12 : vector<2x128xf32> to vector<1x2x128xf32>
    %cst_9 = arith.constant 0.000000e+00 : f32
    %14 = vector.broadcast %cst_9 : f32 to vector<1x2x128xf32>
    %cst_10 = arith.constant 0.000000e+00 : f32
    %15 = vector.broadcast %cst_10 : f32 to vector<1x2x128xf32>
    %c0_i32_11 = arith.constant 0 : i32
    %16 = vector.broadcast %c0_i32_11 : i32 to vector<1x2x128xi32>
    %17 = arith.cmpi eq, %6, %16 : vector<1x2x128xi32>
    %18 = vector.extract_strided_slice %4 {offsets = [0, 0, 0], sizes = [1, 2, 128], strides = [1, 1, 1]} : vector<4x2x128xf32> to vector<1x2x128xf32>
    %19 = arith.select %17, %18, %14 : vector<1x2x128xi1>, vector<1x2x128xf32>
    %20 = vector.extract_strided_slice %11 {offsets = [0, 0, 0], sizes = [1, 2, 128], strides = [1, 1, 1]} : vector<4x2x128xf32> to vector<1x2x128xf32>
    %21 = arith.select %17, %20, %15 : vector<1x2x128xi1>, vector<1x2x128xf32>
    %c1_i32 = arith.constant 1 : i32
    %22 = vector.broadcast %c1_i32 : i32 to vector<1x2x128xi32>
    %23 = arith.cmpi eq, %6, %22 : vector<1x2x128xi32>
    %24 = vector.extract_strided_slice %4 {offsets = [1, 0, 0], sizes = [1, 2, 128], strides = [1, 1, 1]} : vector<4x2x128xf32> to vector<1x2x128xf32>
    %25 = arith.select %23, %24, %19 : vector<1x2x128xi1>, vector<1x2x128xf32>
    %26 = vector.extract_strided_slice %11 {offsets = [1, 0, 0], sizes = [1, 2, 128], strides = [1, 1, 1]} : vector<4x2x128xf32> to vector<1x2x128xf32>
    %27 = arith.select %23, %26, %21 : vector<1x2x128xi1>, vector<1x2x128xf32>
    %c2_i32 = arith.constant 2 : i32
    %28 = vector.broadcast %c2_i32 : i32 to vector<1x2x128xi32>
    %29 = arith.cmpi eq, %6, %28 : vector<1x2x128xi32>
    %30 = vector.extract_strided_slice %4 {offsets = [2, 0, 0], sizes = [1, 2, 128], strides = [1, 1, 1]} : vector<4x2x128xf32> to vector<1x2x128xf32>
    %31 = arith.select %29, %30, %25 : vector<1x2x128xi1>, vector<1x2x128xf32>
    %32 = vector.extract_strided_slice %11 {offsets = [2, 0, 0], sizes = [1, 2, 128], strides = [1, 1, 1]} : vector<4x2x128xf32> to vector<1x2x128xf32>
    %33 = arith.select %29, %32, %27 : vector<1x2x128xi1>, vector<1x2x128xf32>
    %c3_i32 = arith.constant 3 : i32
    %34 = vector.broadcast %c3_i32 : i32 to vector<1x2x128xi32>
    %35 = arith.cmpi eq, %6, %34 : vector<1x2x128xi32>
    %36 = vector.extract_strided_slice %4 {offsets = [3, 0, 0], sizes = [1, 2, 128], strides = [1, 1, 1]} : vector<4x2x128xf32> to vector<1x2x128xf32>
    %37 = arith.select %35, %36, %31 : vector<1x2x128xi1>, vector<1x2x128xf32>
    %38 = vector.extract_strided_slice %11 {offsets = [3, 0, 0], sizes = [1, 2, 128], strides = [1, 1, 1]} : vector<4x2x128xf32> to vector<1x2x128xf32>
    %39 = arith.select %35, %38, %33 : vector<1x2x128xi1>, vector<1x2x128xf32>
    %40 = arith.subf %37, %8 : vector<1x2x128xf32>
    %41 = math.log %13 : vector<1x2x128xf32>
    %42 = arith.subf %40, %41 : vector<1x2x128xf32>
    %cst_12 = arith.constant -13.8155107 : f32
    %cst_13 = arith.constant -1.00000045E-6 : f32
    %43 = vector.broadcast %cst_12 : f32 to vector<1x2x128xf32>
    %44 = arith.maximumf %43, %42 : vector<1x2x128xf32>
    %45 = vector.broadcast %cst_13 : f32 to vector<1x2x128xf32>
    %46 = arith.minimumf %45, %44 : vector<1x2x128xf32>
    %47 = tpu.reciprocal %13 {approx = true} : vector<1x2x128xf32> -> vector<1x2x128xf32>
    %48 = arith.subf %13, %39 : vector<1x2x128xf32>
    %49 = arith.mulf %48, %47 : vector<1x2x128xf32>
    %cst_14 = arith.constant 9.99999997E-7 : f32
    %cst_15 = arith.constant 0.999998986 : f32
    %50 = vector.broadcast %cst_14 : f32 to vector<1x2x128xf32>
    %51 = arith.maximumf %50, %49 : vector<1x2x128xf32>
    %52 = vector.broadcast %cst_15 : f32 to vector<1x2x128xf32>
    %53 = arith.minimumf %52, %51 : vector<1x2x128xf32>
    %cst_16 = arith.constant 1.000000e+00 : f32
    %54 = vector.broadcast %cst_16 : f32 to vector<1x2x128xf32>
    %55 = arith.mulf %54, %53 : vector<1x2x128xf32>
    %56 = arith.mulf %55, %53 : vector<1x2x128xf32>
    %cst_17 = arith.constant -2.500000e-01 : f32
    %57 = vector.broadcast %cst_17 : f32 to vector<1x2x128xf32>
    %58 = arith.mulf %57, %56 : vector<1x2x128xf32>
    %59 = arith.mulf %58, %46 : vector<1x2x128xf32>
    %c0_18 = arith.constant 0 : index
    %c0_19 = arith.constant 0 : index
    %c0_20 = arith.constant 0 : index
    %c0_21 = arith.constant 0 : index
    %60 = vector.load %arg5[%c0_18, %c0_19, %c0_20, %c0_21] : memref<1x1x2x128xf32, #tpu.memory_space<vmem>>, vector<1x1x2x128xf32>
    %61 = vector.shape_cast %59 : vector<1x2x128xf32> to vector<1x1x2x128xf32>
    %62 = arith.addf %60, %61 : vector<1x1x2x128xf32>
    %c0_22 = arith.constant 0 : index
    %c0_23 = arith.constant 0 : index
    %c0_24 = arith.constant 0 : index
    %c0_25 = arith.constant 0 : index
    %63 = vector.load %arg5[%c0_22, %c0_23, %c0_24, %c0_25] : memref<1x1x2x128xf32, #tpu.memory_space<vmem>>, vector<1x1x2x128xf32>
    tpu.vector_store %arg5[%c0_22, %c0_23, %c0_24, %c0_25], %62 {strides = array<i32>} : memref<1x1x2x128xf32, #tpu.memory_space<vmem>>, vector<1x1x2x128xf32>,
    return
  }
  func.func @transform_0(%arg0: i32, %arg1: i32, %arg2: i32) -> (i32, i32, i32, i32) {
    %c1_i32 = arith.constant 1 : i32
    %0 = arith.muli %arg1, %c1_i32 : i32
    %1 = arith.addi %0, %arg2 : i32
    %c0_i32 = arith.constant 0 : i32
    %c0_i32_0 = arith.constant 0 : i32
    %c0_i32_1 = arith.constant 0 : i32
    return %arg0, %c0_i32, %1, %c0_i32_0 : i32, i32, i32, i32
  }
  func.func @transform_1(%arg0: i32, %arg1: i32, %arg2: i32) -> (i32, i32, i32, i32) {
    %c1_i32 = arith.constant 1 : i32
    %0 = arith.muli %arg1, %c1_i32 : i32
    %1 = arith.addi %0, %arg2 : i32
    %c0_i32 = arith.constant 0 : i32
    %c0_i32_0 = arith.constant 0 : i32
    %c0_i32_1 = arith.constant 0 : i32
    return %arg0, %c0_i32, %1, %c0_i32_0 : i32, i32, i32, i32
  }
  func.func @transform_2(%arg0: i32, %arg1: i32, %arg2: i32) -> (i32, i32, i32, i32) {
    %c0_i32 = arith.constant 0 : i32
    %c0_i32_0 = arith.constant 0 : i32
    %c0_i32_1 = arith.constant 0 : i32
    return %arg0, %arg1, %c0_i32, %c0_i32_0 : i32, i32, i32, i32
  }
}

</mosaic_0001>

<llo_original>
// kernel: tpu_custom_call.1
$region0: #{tpu_custom_call.1}
  #allocation0 [shape = 'u32[]', space=smem, size = 0x4, offset = 0x4, fixed_abs, tag = 'smem constant byte address 0x4 - core index']
  #allocation1 [shape = 'u32[144,128]{1,0:T(1,128)}', space=vmem, size = 0x12000, scoped, tag = 'internal scratch']
  %s0 = inlined_call_operand.hbm [shape: f32[2,4,2,128], index: 0, kind: input, shape index: {}]
  %s1 = inlined_call_operand.hbm [shape: s32[2,1,2,128], index: 1, kind: input, shape index: {}]
  %s2 = inlined_call_operand.hbm [shape: f32[2,1,2,128], index: 2, kind: output, shape index: {}]
  %s3 = sld [smem:[#allocation0]]
  $region53: #{tpu_custom_call.1} parent=0
    _
  %s5 = ssub.s32 1, %s3
  %s6 = scalar_select 0, %s5, %s3
  $region1: #{tpu_custom_call.1} parent=0
    #allocation2 [shape = 'u8[8192]{0}', space=vmem, size = 0x2000, scoped, tag = 'input window, operand 0']
    #allocation3 [shape = 's32[2]{0}', space=sflag, size = 0x8, scoped, tag = 'scoped memory for tpu_custom_call.1']
    #allocation4 [shape = 's32[2]{0}', space=sflag, size = 0x8, scoped, tag = 'scoped memory for tpu_custom_call.1']
    #allocation5 [shape = 'u8[2048]{0}', space=vmem, size = 0x800, scoped, tag = 'input window, operand 1']
    #allocation6 [shape = 's32[2]{0}', space=sflag, size = 0x8, scoped, tag = 'scoped memory for tpu_custom_call.1']
    #allocation7 [shape = 'u8[2048]{0}', space=vmem, size = 0x800, scoped, tag = 'output window, operand 0']
    %7 = vsyncpa [#allocation3], 0
    %s8 = scalar_lea.sflag [#allocation3], 1
    %9 = vsyncpa %s8, 0
    %10 = vsyncpa [#allocation6], 0
    %s11 = scalar_lea.sflag [#allocation6], 1
    %12 = vsyncpa %s11, 0
    %13 = vsyncpa [#allocation4], 0
    %s14 = scalar_lea.sflag [#allocation4], 1
    %15 = vsyncpa %s14, 0
    loop: start=0, step=1, limit=4
    $region2: #{tpu_custom_call.1} parent=1 // loop_pre_header
      _
    $region3: #{tpu_custom_call.1} parent=1 // loop_header
      %s17 = sphi 0, %s21
      %p18 = scmp.ge.s32.totalorder %s17, 4
      %s24 = sphi 0, %s43
      %s25 = sphi 0, %s39
      %s26 = sphi 0, %s35
      %s27 = sphi 0, %s24
      %s28 = sphi 0, %s25
      %s29 = sphi 0, %s26
      %s30 = sphi 0, %s27
      %s31 = sphi 0, %s28
      %s32 = sphi 0, %s29
      %s50 = sphi 0, %s52
      %s53 = sphi 0, %s50
      %s54 = sphi 0, %s53
      %s70 = sphi 0, %s54
      %s80 = sphi 0, %s82
      %s83 = sphi 0, %s80
      %s84 = sphi 0, %s83
      %s100 = sphi 0, %s84
      %s108 = sphi 0, %s110
      %s111 = sphi 0, %s108
      %s112 = sphi 0, %s111
      %s128 = sphi 0, %s112
    $region4: #{tpu_custom_call.1} parent=1 // loop_header_branch
      %20 = sbr.rel (%p18) target = $region8
    $region5: #{tpu_custom_call.1} parent=1 // loop_body
      %s22 = ssub.s32 %s17, 1
      %s23 = ssub.s32 %s17, 2
      %s33 = sadd.s32 1, %s26
      %p34 = scmp.ge.s32.totalorder %s33, 1
      %s35 = scalar_select %p34, 0, %s33
      %s36 = sadd.s32 1, %s25
      %s37 = scalar_select %p34, %s36, %s25
      %p38 = scmp.ge.s32.totalorder %s37, 1
      %s39 = scalar_select %p38, 0, %s37
      %s40 = sadd.s32 1, %s24
      %s41 = scalar_select %p38, %s40, %s24
      %p42 = scmp.ge.s32.totalorder %s41, 2
      %s43 = scalar_select %p42, 0, %s41
      %s44 = sadd.s32 %s25, %s26
      %s45 = sadd.s32 %s39, %s35
      %s46 = ssub.s32 %s24, %s43
      %s47 = ssub.s32 %s44, %s45
      %s48 = sor.u32 %s46, %s47
      %p49 = scmp.eq.s32.totalorder %s48, 0
      %s51 = sadd.s32 %s50, 1
      %s52 = scalar_select %p49, %s50, %s51
      %p55 = pneg %p49
      %p56 = scmp.eq.s32.totalorder %s17, 1
      %p57 = por %p55, %p56
      %p58 = scmp.ne.s32.totalorder %s50, %s53
      %p59 = scmp.eq.s32.totalorder %s17, 0
      %p60 = por %p58, %p59
      %p61 = scmp.ne.s32.totalorder %s50, %s53
      %p62 = scmp.eq.s32.totalorder %s22, 1
      %p63 = por %p61, %p62
      %p64 = scmp.ne.s32.totalorder %s53, %s54
      %p65 = scmp.eq.s32.totalorder %s22, 0
      %p66 = por %p64, %p65
      %p67 = scmp.ne.s32.totalorder %s53, %s54
      %p68 = scmp.eq.s32.totalorder %s23, 1
      %p69 = por %p67, %p68
      %p71 = scmp.ne.s32.totalorder %s54, %s70
      %p72 = scmp.eq.s32.totalorder %s23, 0
      %p73 = por %p71, %p72
      %s74 = sadd.s32 %s25, %s26
      %s75 = sadd.s32 %s39, %s35
      %s76 = ssub.s32 %s24, %s43
      %s77 = ssub.s32 %s74, %s75
      %s78 = sor.u32 %s76, %s77
      %p79 = scmp.eq.s32.totalorder %s78, 0
      %s81 = sadd.s32 %s80, 1
      %s82 = scalar_select %p79, %s80, %s81
      %p85 = pneg %p79
      %p86 = scmp.eq.s32.totalorder %s17, 1
      %p87 = por %p85, %p86
      %p88 = scmp.ne.s32.totalorder %s80, %s83
      %p89 = scmp.eq.s32.totalorder %s17, 0
      %p90 = por %p88, %p89
      %p91 = scmp.ne.s32.totalorder %s80, %s83
      %p92 = scmp.eq.s32.totalorder %s22, 1
      %p93 = por %p91, %p92
      %p94 = scmp.ne.s32.totalorder %s83, %s84
      %p95 = scmp.eq.s32.totalorder %s22, 0
      %p96 = por %p94, %p95
      %p97 = scmp.ne.s32.totalorder %s83, %s84
      %p98 = scmp.eq.s32.totalorder %s23, 1
      %p99 = por %p97, %p98
      %p101 = scmp.ne.s32.totalorder %s84, %s100
      %p102 = scmp.eq.s32.totalorder %s23, 0
      %p103 = por %p101, %p102
      %s104 = ssub.s32 %s24, %s43
      %s105 = ssub.s32 %s25, %s39
      %s106 = sor.u32 %s104, %s105
      %p107 = scmp.eq.s32.totalorder %s106, 0
      %s109 = sadd.s32 %s108, 1
      %s110 = scalar_select %p107, %s108, %s109
      %p113 = pneg %p107
      %p114 = scmp.eq.s32.totalorder %s17, 1
      %p115 = por %p113, %p114
      %p116 = scmp.ne.s32.totalorder %s108, %s111
      %p117 = scmp.eq.s32.totalorder %s17, 0
      %p118 = por %p116, %p117
      %p119 = scmp.ne.s32.totalorder %s108, %s111
      %p120 = scmp.eq.s32.totalorder %s22, 1
      %p121 = por %p119, %p120
      %p122 = scmp.ne.s32.totalorder %s111, %s112
      %p123 = scmp.eq.s32.totalorder %s22, 0
      %p124 = por %p122, %p123
      %p125 = scmp.ne.s32.totalorder %s111, %s112
      %p126 = scmp.eq.s32.totalorder %s23, 1
      %p127 = por %p125, %p126
      %p129 = scmp.ne.s32.totalorder %s112, %s128
      %p130 = scmp.eq.s32.totalorder %s23, 0
      %p131 = por %p129, %p130
      %p132 = scmp.le.s32.totalorder 1, %s17
      %p133 = scmp.lt.s32.totalorder %s17, 3
      %p134 = pnand %p132, %p133
      %p135 = pneg %p134
      // Predicated region
      $region9: #{tpu_custom_call.1} parent=5 // pred_check
        _
      $region10: #{tpu_custom_call.1} parent=5 // pred_check_branch
        %137 = sbr.rel (%p134) target = $region12
      $region11: #{tpu_custom_call.1} parent=5 // pred_region
        %s138 = ssub.s32 %s17, 1
      $region12: #{tpu_custom_call.1} parent=5 // pred_fallthru
        _
      %p139 = scmp.lt.s32.totalorder %s17, 2
      // Predicated region
      $region13: #{tpu_custom_call.1} parent=5 // pred_check
        %p140 = pneg %p139
      $region14: #{tpu_custom_call.1} parent=5 // pred_check_branch
        %142 = sbr.rel (%p140) target = $region16
      $region15: #{tpu_custom_call.1} parent=5 // pred_region
        // Predicated region
        $region17: #{tpu_custom_call.1} parent=15 // pred_check
          %p143 = pneg %p60
        $region18: #{tpu_custom_call.1} parent=15 // pred_check_branch
          %145 = sbr.rel (%p143) target = $region20
        $region19: #{tpu_custom_call.1} parent=15 // pred_region
          %s146 = sand.u32 %s50, 1
          %s147 = scalar_lea.sflag [#allocation3], %s146
          %s148 = sand.u32 %s50, 1
          %s149 = smul.addr %s148, 8
          %s150 = scalar_lea.vmem [#allocation2], %s149
          %s151 = sadd.s32 %s25, %s26
          %s153 = ssub.s32 128, 128
          %154 = vsyncadd %s147, %s153
          %s155 = smul.addr %s24, 4
          %s156 = sadd.s32 %s151, %s155
          %s157 = smul.addr %s156, 32
          %s158 = scalar_lea.hbm %s0, %s157
          %s159 = sshll.u32 %s150, 4
          %s160 = int_to_ptr.vmem [resolvable:$true] %s159
          %165 = dma.hbm_to_vmem [thread:$0]  %s158, 128, %s160, %s147, 32, 32, 2
        $region20: #{tpu_custom_call.1} parent=15 // pred_fallthru
          _
        // Predicated region
        $region21: #{tpu_custom_call.1} parent=15 // pred_check
          %p166 = pneg %p90
        $region22: #{tpu_custom_call.1} parent=15 // pred_check_branch
          %168 = sbr.rel (%p166) target = $region24
        $region23: #{tpu_custom_call.1} parent=15 // pred_region
          %s169 = sand.u32 %s80, 1
          %s170 = scalar_lea.sflag [#allocation6], %s169
          %s171 = sand.u32 %s80, 1
          %s172 = smul.addr %s171, 2
          %s173 = scalar_lea.vmem [#allocation5], %s172
          %s174 = sadd.s32 %s25, %s26
          %s176 = ssub.s32 32, 32
          %177 = vsyncadd %s170, %s176
          %s178 = sadd.s32 %s174, %s24
          %s179 = smul.addr %s178, 32
          %s180 = scalar_lea.hbm %s1, %s179
          %s182 = sshll.u32 %s173, 4
          %s183 = int_to_ptr.vmem [resolvable:$true] %s182
          %185 = dma.hbm_to_vmem [thread:$0]  %s180, 32, %s183, %s170
        $region24: #{tpu_custom_call.1} parent=15 // pred_fallthru
          _
      $region16: #{tpu_custom_call.1} parent=5 // pred_fallthru
        _
      %p186 = scmp.le.s32.totalorder 1, %s17
      %p187 = scmp.lt.s32.totalorder %s17, 3
      %p188 = pnand %p186, %p187
      %p189 = pneg %p188
      // Predicated region
      $region25: #{tpu_custom_call.1} parent=5 // pred_check
        _
      $region26: #{tpu_custom_call.1} parent=5 // pred_check_branch
        %191 = sbr.rel (%p188) target = $region28
      $region27: #{tpu_custom_call.1} parent=5 // pred_region
        %s192 = ssub.s32 %s17, 1
        %s193 = sand.u32 %s53, 1
        %s194 = scalar_lea.sflag [#allocation3], %s193
        %s195 = sand.u32 %s53, 1
        %s196 = smul.addr %s195, 8
        %s197 = scalar_lea.vmem [#allocation2], %s196
        // Predicated region
        $region29: #{tpu_custom_call.1} parent=27 // pred_check
          %p198 = pneg %p66
        $region30: #{tpu_custom_call.1} parent=27 // pred_check_branch
          %200 = sbr.rel (%p198) target = $region32
        $region31: #{tpu_custom_call.1} parent=27 // pred_region
          %201 = dma.done %s194, 128
        $region32: #{tpu_custom_call.1} parent=27 // pred_fallthru
          _
        %s202 = sand.u32 %s83, 1
        %s203 = scalar_lea.sflag [#allocation6], %s202
        %s204 = sand.u32 %s83, 1
        %s205 = smul.addr %s204, 2
        %s206 = scalar_lea.vmem [#allocation5], %s205
        // Predicated region
        $region33: #{tpu_custom_call.1} parent=27 // pred_check
          %p207 = pneg %p96
        $region34: #{tpu_custom_call.1} parent=27 // pred_check_branch
          %209 = sbr.rel (%p207) target = $region36
        $region35: #{tpu_custom_call.1} parent=27 // pred_region
          %210 = dma.done %s203, 32
        $region36: #{tpu_custom_call.1} parent=27 // pred_fallthru
          _
        %s211 = sand.u32 %s53, 1
        %s212 = scalar_lea.sflag [#allocation3], %s211
        %s213 = sand.u32 %s53, 1
        %s214 = smul.addr %s213, 8
        %s215 = scalar_lea.vmem [#allocation2], %s214
        %p216 = pneg %p66
        %p217 = pneg %p63
        %s218 = sand.u32 %s83, 1
        %s219 = scalar_lea.sflag [#allocation6], %s218
        %s220 = sand.u32 %s83, 1
        %s221 = smul.addr %s220, 2
        %s222 = scalar_lea.vmem [#allocation5], %s221
        %p223 = pneg %p96
        %p224 = pneg %p93
        %p225 = pneg %p124
        %p226 = pneg %p121
        %s227 = sand.u32 %s111, 1
        %s228 = scalar_lea.sflag [#allocation4], %s227
        %s229 = sand.u32 %s111, 1
        %s230 = smul.addr %s229, 2
        %s231 = scalar_lea.vmem [#allocation7], %s230
        %s232 = sadd.s32 %s28, %s29
        %s233 = sadd.s32 %s28, %s29
        %p234 = scmp.eq.s32.totalorder %s29, 0
        // Predicated region
        $region37: #{tpu_custom_call.1} parent=27 // pred_check
          %p235 = pneg %p234
        $region38: #{tpu_custom_call.1} parent=27 // pred_check_branch
          %237 = sbr.rel (%p235) target = $region40
        $region39: #{tpu_custom_call.1} parent=27 // pred_region
          %238 = vst [vmem:[%s231] sm:$0x3] 0.0
        $region40: #{tpu_custom_call.1} parent=27 // pred_fallthru
          _
        %v239 = vld [vmem:[%s197] sm:$0x3]
        %v240 = vld [vmem:[%s197 + $0x2] sm:$0x3]
        %v241 = vld [vmem:[%s197 + $0x4] sm:$0x3]
        %v242 = vld [vmem:[%s197 + $0x6] sm:$0x3]
        %v243 = vld [vmem:[%s206] sm:$0x3]
        %vm244 = vcmask 1041408
        %v245 = vsel %vm244, %v239, -inf
        %v246 = vsel %vm244, %v240, -inf
        %v247 = vsel %vm244, %v241, -inf
        %v248 = vsel %vm244, %v242, -inf
        %v249 = vmax.f32 %v245, %v246
        %v250 = vmax.f32 %v247, %v248
        %v251 = vmax.f32 %v249, %v250
        %v252 = vsub.f32 %v239, %v251
        %v253 = vsub.f32 %v240, %v251
        %v254 = vsub.f32 %v241, %v251
        %v255 = vsub.f32 %v242, %v251
        %v256 = vmul.f32 %v252, 1.442695
        %v257 = vpow.pop %v256
        %v258 = vmul.f32 %v253, 1.442695
        %v259 = vpow.pop %v258
        %v260 = vmul.f32 %v254, 1.442695
        %v261 = vpow.pop %v260
        %v262 = vmul.f32 %v255, 1.442695
        %v263 = vpow.pop %v262
        %v264 = vsel %vm244, %v257, 0.0
        %v265 = vsel %vm244, %v259, 0.0
        %v266 = vadd.f32 %v264, %v265
        %v267 = vsel %vm244, %v261, 0.0
        %v268 = vadd.f32 %v266, %v267
        %v269 = vsel %vm244, %v263, 0.0
        %v270 = vadd.f32 %v268, %v269
        %vm271 = vcmp.eq.s32.totalorder %v243, 0
        %v272 = vsel %vm271, %v239, 0.0
        %v273 = vsel %vm271, %v257, 0.0
        %vm274 = vcmp.eq.s32.totalorder %v243, 1
        %v275 = vsel %vm274, %v240, %v272
        %v276 = vsel %vm274, %v259, %v273
        %vm277 = vcmp.eq.s32.totalorder %v243, 2
        %v278 = vsel %vm277, %v241, %v275
        %v279 = vsel %vm277, %v261, %v276
        %vm280 = vcmp.eq.s32.totalorder %v243, 3
        %v281 = vsel %vm280, %v242, %v278
        %v282 = vsel %vm280, %v263, %v279
        %v283 = vsub.f32 %v281, %v251
        %v284 = vlog2.pop %v270
        %v285 = vmul.f32 %v284, 0.6931472
        %v286 = vsub.f32 %v283, %v285
        %v287 = vmax.f32 %v286, -13.815511
        %v288 = vmin.f32 %v287, -1.0000005e-06
        %v289 = vrcp.pop %v270
        %v290 = vsub.f32 %v270, %v282
        %v291 = vmul.f32 %v290, %v289
        %v292 = vmax.f32 %v291, 1e-06
        %v293 = vmin.f32 %v292, 0.999999
        %v294 = vmul.f32 %v293, %v293
        %v295 = vmul.f32 %v294, -0.25
        %v296 = vmul.f32 %v295, %v288
        %v297 = vld [vmem:[%s231] sm:$0x3]
        %v298 = vadd.f32 %v297, %v296
        %299 = vst [vmem:[%s231] sm:$0x3] %v298
        %s300 = sand.u32 %s111, 1
        %s301 = scalar_lea.sflag [#allocation4], %s300
        %s302 = sand.u32 %s111, 1
        %s303 = smul.addr %s302, 2
        %s304 = scalar_lea.vmem [#allocation7], %s303
        // Predicated region
        $region41: #{tpu_custom_call.1} parent=27 // pred_check
          %p305 = pneg %p121
        $region42: #{tpu_custom_call.1} parent=27 // pred_check_branch
          %307 = sbr.rel (%p305) target = $region44
        $region43: #{tpu_custom_call.1} parent=27 // pred_region
          %s309 = ssub.s32 32, 32
          %310 = vsyncadd %s301, %s309
          %s311 = sadd.s32 %s28, %s27
          %s312 = smul.addr %s311, 32
          %s313 = scalar_lea.hbm %s2, %s312
          %s315 = sshll.u32 %s304, 4
          %s316 = int_to_ptr.vmem [resolvable:$true] %s315
          %318 = dma.vmem_to_hbm [thread:$0]  %s316, 32, %s313, %s301
        $region44: #{tpu_custom_call.1} parent=27 // pred_fallthru
          _
      $region28: #{tpu_custom_call.1} parent=5 // pred_fallthru
        _
      %p319 = scmp.le.s32.totalorder 2, %s17
      // Predicated region
      $region45: #{tpu_custom_call.1} parent=5 // pred_check
        %p320 = pneg %p319
      $region46: #{tpu_custom_call.1} parent=5 // pred_check_branch
        %322 = sbr.rel (%p320) target = $region48
      $region47: #{tpu_custom_call.1} parent=5 // pred_region
        %s323 = ssub.s32 %s17, 2
        // Predicated region
        $region49: #{tpu_custom_call.1} parent=47 // pred_check
          %p324 = pneg %p127
        $region50: #{tpu_custom_call.1} parent=47 // pred_check_branch
          %326 = sbr.rel (%p324) target = $region52
        $region51: #{tpu_custom_call.1} parent=47 // pred_region
          %s327 = sand.u32 %s112, 1
          %s328 = scalar_lea.sflag [#allocation4], %s327
          %s329 = sand.u32 %s112, 1
          %s330 = smul.addr %s329, 2
          %s331 = scalar_lea.vmem [#allocation7], %s330
          %332 = dma.done %s328, 32
        $region52: #{tpu_custom_call.1} parent=47 // pred_fallthru
          _
      $region48: #{tpu_custom_call.1} parent=5 // pred_fallthru
        _
    $region6: #{tpu_custom_call.1} parent=1 // loop_footer
      %s21 = sadd.s32 1, %s17
    $region7: #{tpu_custom_call.1} parent=1 // loop_footer_branch
      %16 = sbr.rel target = $region3
    $region8: #{tpu_custom_call.1} parent=1 // loop_exit
      _
    %333 = vsyncpa [#allocation3], 1
    %s334 = scalar_lea.sflag [#allocation3], 1
    %335 = vsyncpa %s334, 1
    %336 = vsyncpa [#allocation6], 1
    %s337 = scalar_lea.sflag [#allocation6], 1
    %338 = vsyncpa %s337, 1
    %339 = vsyncpa [#allocation4], 1
    %s340 = scalar_lea.sflag [#allocation4], 1
    %341 = vsyncpa %s340, 1

</llo_original>
